<compile_context>
chip_gen: v6e
topology: v6e:2x2x1
jax: 0.10.0
libtpu: 0.0.40
codegen_flags: <defaults>
</compile_context>

<pallas_src>
import functools

import jax
import jax.numpy as jnp
from jax.experimental import pallas as pl
from jax.experimental.pallas import tpu as pltpu


def _round_up(x, m):
    return (x + m - 1) // m * m


def _pad2(a, rows, cols, dtype):
    return jnp.pad(a, ((0, rows - a.shape[0]), (0, cols - a.shape[1]))).astype(dtype)


def _vmem_budget():
    """Generation-aware usable-VMEM budget (leave headroom for compiler scratch)."""
    try:
        info = pltpu.get_tpu_info()
        cap = int(getattr(info, "vmem_capacity_bytes", 64 << 20))
    except Exception:
        cap = 64 << 20                      # conservative fallback (v7x-sized)
    # ~80%: v5e/v6e (128 MiB) -> ~102 MiB usable, v7x (64 MiB) -> ~51 MiB usable.
    return max(16 << 20, int(cap * 0.8))


def _clamp_limit(nbytes, budget):
    return int(min(max(nbytes, 16 << 20), budget))


# --------------------------- Kernel 1: MLP ---------------------------

def mlp_kernel(x_ref, w1_ref, b1_ref, w2_ref, b2_ref, z0_ref):
    # lin1 -> relu -> lin2  (dropout is identity in eval mode)
    h = jnp.dot(x_ref[...], w1_ref[...], preferred_element_type=jnp.float32)
    h = jnp.maximum(h + b1_ref[...], 0.0)
    z0 = jnp.dot(h.astype(jnp.bfloat16), w2_ref[...],
                 preferred_element_type=jnp.float32) + b2_ref[...]
    z0_ref[...] = z0.astype(z0_ref.dtype)        # single bf16 z0 output


# --------------------- Kernel 2: APPNP propagation -------------------

def prop_kernel(z0_hbm_ref, z0_ref, a_ref, o_ref, zbuf_ref, seed_sem,
                *, num_classes, alpha, a_resident, tm):
    k = pl.program_id(0)            # propagation step (outer, sequential)
    i = pl.program_id(1)            # node-row tile (inner, sequential)
    cur = k % 2

    # One-shot seed of the bf16 ping-pong state with z0 (single HBM->VMEM DMA).
    @pl.when(jnp.logical_and(k == 0, i == 0))
    def _():
        cp = pltpu.make_async_copy(z0_hbm_ref, zbuf_ref.at[0], seed_sem)
        cp.start()
        cp.wait()

    row0 = pl.multiple_of(i * tm, tm)
    if a_resident:
        a_tile = a_ref[pl.ds(row0, tm), :]       # resident A_bar: slice VMEM copy
    else:
        a_tile = a_ref[...]                      # streamed A_bar row tile

    z_old = zbuf_ref[cur]                        # [N_pad, C_pad] bf16, no cast
    # z_new = (1-alpha) * A_hat @ z_old + alpha * z0   ((1-alpha) folded into A).
    z_new = jnp.dot(a_tile, z_old, preferred_element_type=jnp.float32)
    z_new = z_new + alpha * z0_ref[...].astype(jnp.float32)

    zbuf_ref[1 - cur, pl.ds(row0, tm), :] = z_new.astype(zbuf_ref.dtype)

    # Final step: masked log_softmax over the lane-padded class dim, fused.
    @pl.when(k == pl.num_programs(0) - 1)
    def _():
        col = jax.lax.broadcasted_iota(jnp.int32, z_new.shape, 1)
        valid = col < num_classes
        zm = jnp.where(valid, z_new, -jnp.inf)
        m = jnp.max(zm, axis=1, keepdims=True)
        e = jnp.where(valid, jnp.exp(zm - m), 0.0)
        lse = m + jnp.log(jnp.sum(e, axis=1, keepdims=True))
        o_ref[...] = (z_new - lse).astype(o_ref.dtype)


# ------------------------------ Wrapper -------------------------------

def appnp_forward(x, w1, b1, w2, b2, a_hat, *, K, alpha, tm=512):
    """x:[N,F], w1:[F,H], b1:[H], w2:[H,C], b2:[C], a_hat:[N,N] GCN-normalized."""
    assert K >= 1, "APPNP with K=0 reduces to the MLP; not handled here"
    N, F = x.shape
    H = w1.shape[1]
    C = w2.shape[1]

    budget = _vmem_budget()

    F_pad = _round_up(F, 128)
    H_pad = _round_up(H, 128)
    C_pad = _round_up(C, 128)

    # Tile size: multiple of 16 (bf16 sublane packing), as large as fits.
    tm = max(16, min(int(tm), _round_up(N, 16)))
    tm = (tm // 16) * 16
    margin = 4 << 20
    while True:
        N_pad = _round_up(N, tm)
        state_bytes = 2 * N_pad * C_pad * 2                    # bf16 ping-pong scratch
        tile_bytes = 2 * tm * C_pad * 2 + 2 * tm * C_pad * 4   # z0 tile + out tile (dbl-buf)
        a_res_bytes = 2 * N_pad * N_pad * 2                    # resident A (budget 2x)
        a_stream_bytes = 2 * tm * N_pad * 2                    # streamed A row tile
        a_resident = a_res_bytes + state_bytes + tile_bytes + margin <= budget
        stream_fit = a_stream_bytes + state_bytes + tile_bytes + margin <= budget
        if a_resident or stream_fit or tm <= 16:
            break
        tm = max(16, (tm // 2 // 16) * 16)

    num_tiles = N_pad // tm

    x_p = _pad2(x, N_pad, F_pad, jnp.bfloat16)
    w1_p = _pad2(w1, F_pad, H_pad, jnp.bfloat16)
    w2_p = _pad2(w2, H_pad, C_pad, jnp.bfloat16)
    b1_p = jnp.pad(b1, (0, H_pad - H)).reshape(1, H_pad).astype(jnp.float32)
    b2_p = jnp.pad(b2, (0, C_pad - C)).reshape(1, C_pad).astype(jnp.float32)
    # Fold the (1 - alpha) teleport scale into A_hat once on the host; bf16 stream.
    a_p = _pad2((1.0 - alpha) * a_hat, N_pad, N_pad, jnp.bfloat16)

    # ---------------- Kernel 1: MLP (row-parallel grid) ----------------
    mlp_vmem = _clamp_limit(
        2 * (tm * F_pad * 2 + F_pad * H_pad * 2 + H_pad * 4
             + H_pad * C_pad * 2 + C_pad * 4 + tm * C_pad * 2) + margin,
        budget)
    mlp_cost = pl.CostEstimate(
        flops=2 * N_pad * F_pad * H_pad + 2 * N_pad * H_pad * C_pad,
        transcendentals=0,
        bytes_accessed=(N_pad * F_pad * 2 + F_pad * H_pad * 2 + H_pad * 4
                        + H_pad * C_pad * 2 + C_pad * 4 + N_pad * C_pad * 2))
    z0 = pl.pallas_call(
        mlp_kernel,
        out_shape=jax.ShapeDtypeStruct((N_pad, C_pad), jnp.bfloat16),
        grid_spec=pltpu.PrefetchScalarGridSpec(
            num_scalar_prefetch=0,
            grid=(num_tiles,),
            in_specs=[
                pl.BlockSpec((tm, F_pad), lambda i: (i, 0)),
                pl.BlockSpec((F_pad, H_pad), lambda i: (0, 0)),
                pl.BlockSpec((1, H_pad), lambda i: (0, 0)),
                pl.BlockSpec((H_pad, C_pad), lambda i: (0, 0)),
                pl.BlockSpec((1, C_pad), lambda i: (0, 0)),
            ],
            out_specs=pl.BlockSpec((tm, C_pad), lambda i: (i, 0)),
        ),
        compiler_params=pltpu.CompilerParams(
            dimension_semantics=("parallel",),
            vmem_limit_bytes=mlp_vmem),
        cost_estimate=mlp_cost,
    )(x_p, w1_p, b1_p, w2_p, b2_p)

    # -------- Kernel 2: K APPNP propagation steps + fused log_softmax --------
    if a_resident:
        a_spec = pl.BlockSpec((N_pad, N_pad), lambda k, i: (0, 0))  # DMA'd once
        a_read_bytes = N_pad * N_pad * 2
        a_vmem = 2 * N_pad * N_pad * 2
    else:
        a_spec = pl.BlockSpec((tm, N_pad), lambda k, i: (i, 0))     # streamed each step
        a_read_bytes = K * N_pad * N_pad * 2
        a_vmem = 2 * tm * N_pad * 2

    last_k = K - 1
    # Pin the out block index for k < K-1 so garbage tiles are never written back.
    out_spec = pl.BlockSpec((tm, C_pad),
                            lambda k, i: (jnp.where(k == last_k, i, 0), 0))

    prop_vmem = _clamp_limit(
        a_vmem + 2 * N_pad * C_pad * 2 + 2 * tm * C_pad * 2
        + 2 * tm * C_pad * 4 + margin,
        budget)
    prop_cost = pl.CostEstimate(
        flops=K * 2 * N_pad * N_pad * C_pad,
        transcendentals=N_pad * C_pad + N_pad,
        bytes_accessed=(a_read_bytes
                        + N_pad * C_pad * 2            # one-shot z0 seed DMA
                        + K * N_pad * C_pad * 2        # streamed z0 teleport tiles
                        + N_pad * C_pad * 4))          # final output write
    out_pad = pl.pallas_call(
        functools.partial(prop_kernel, num_classes=C, alpha=float(alpha),
                          a_resident=a_resident, tm=tm),
        out_shape=jax.ShapeDtypeStruct((N_pad, C_pad), jnp.float32),
        grid_spec=pltpu.PrefetchScalarGridSpec(
            num_scalar_prefetch=0,
            grid=(K, num_tiles),
            in_specs=[
                pl.BlockSpec(memory_space=pl.ANY),               # z0 in HBM (seed DMA)
                pl.BlockSpec((tm, C_pad), lambda k, i: (i, 0)),  # z0 tile (teleport add)
                a_spec,                                          # A_bar
            ],
            out_specs=out_spec,
            scratch_shapes=[
                pltpu.VMEM((2, N_pad, C_pad), jnp.bfloat16),     # bf16 ping-pong state
                pltpu.SemaphoreType.DMA,                         # seed DMA semaphore
            ],
        ),
        compiler_params=pltpu.CompilerParams(
            # Must stay ("arbitrary","arbitrary"): the ping-pong state scratch is
            # shared across row tiles and propagation steps on one TensorCore.
            dimension_semantics=("arbitrary", "arbitrary"),
            vmem_limit_bytes=prop_vmem),
        cost_estimate=prop_cost,
    )(z0, z0, a_p)

    return out_pad[:N, :C]


def gcn_norm_dense(edge_index, num_nodes):
    """Dense \\hat{A} = D^{-1/2} (A + I) D^{-1/2}, matching PyG gcn_norm."""
    src, dst = edge_index[0], edge_index[1]
    a = jnp.zeros((num_nodes, num_nodes), jnp.float32)
    a = a.at[dst, src].add(1.0)                          # message flows src -> dst
    diag = jnp.diagonal(a)
    a = a + jnp.diag(jnp.where(diag > 0.0, 0.0, 1.0))    # add *remaining* self-loops
    deg = jnp.sum(a, axis=1)
    dinv = jnp.where(deg > 0, jax.lax.rsqrt(deg), 0.0)
    return dinv[:, None] * a * dinv[None, :]


if __name__ == "__main__":
    # Small config consistent with APPNPbase(args)
    N = 16            # number of graph nodes
    num_features = 8
    hidden = 32
    num_classes = 4
    K = 10
    alpha = 0.1

    key = jax.random.PRNGKey(0)
    kx, kw1, kb1, kw2, kb2, ke = jax.random.split(key, 6)

    x = jax.random.normal(kx, (N, num_features), jnp.float32)

    # Deterministic parameter init (uniform, Linear-like scale); stored as [in, out].
    lim1 = 1.0 / (num_features ** 0.5)
    w1 = jax.random.uniform(kw1, (num_features, hidden), jnp.float32, -lim1, lim1)
    b1 = jax.random.uniform(kb1, (hidden,), jnp.float32, -lim1, lim1)
    lim2 = 1.0 / (hidden ** 0.5)
    w2 = jax.random.uniform(kw2, (hidden, num_classes), jnp.float32, -lim2, lim2)
    b2 = jax.random.uniform(kb2, (num_classes,), jnp.float32, -lim2, lim2)

    # Deterministic edge_index: ring graph (both directions) + a few random edges.
    ring_src = jnp.arange(N, dtype=jnp.int32)
    ring_dst = (ring_src + 1) % N
    extra_src = jax.random.randint(ke, (8,), 0, N, jnp.int32)
    extra_dst = (extra_src + 5) % N
    src = jnp.concatenate([ring_src, ring_dst, extra_src])
    dst = jnp.concatenate([ring_dst, ring_src, extra_dst])
    edge_index = jnp.stack([src, dst], axis=0)           # [2, E]

    a_hat = gcn_norm_dense(edge_index, N)

    out = appnp_forward(x, w1, b1, w2, b2, a_hat, K=K, alpha=alpha)
    out = jax.block_until_ready(out)

    # Pure-JAX f32 reference for validation.
    h = jnp.maximum(x @ w1 + b1, 0.0)
    z0 = h @ w2 + b2
    z = z0
    for _ in range(K):
        z = (1.0 - alpha) * (a_hat @ z) + alpha * z0
    ref = jax.nn.log_softmax(z, axis=1)

    assert out.shape == (N, num_classes)
    assert bool(jnp.all(jnp.isfinite(out)))
    # log_softmax rows should sum to ~1 in prob space
    assert bool(jnp.allclose(jnp.sum(jnp.exp(out), axis=1), 1.0, atol=1e-4))
    # bf16-streamed kernel vs f32 reference (loose tolerance for bf16 rounding)
    assert float(jnp.max(jnp.abs(out - ref))) < 0.1
    print("KERNEL_OK")
</pallas_src>

<mosaic_0001>
module attributes {stable_mosaic.version = 11 : i64} {
  func.func @mlp_kernel(%arg0: i32, %arg1: memref<16x128xbf16, #tpu.memory_space<vmem>>, %arg2: memref<128x128xbf16, #tpu.memory_space<vmem>>, %arg3: memref<1x128xf32, #tpu.memory_space<vmem>>, %arg4: memref<128x128xbf16, #tpu.memory_space<vmem>>, %arg5: memref<1x128xf32, #tpu.memory_space<vmem>>, %arg6: memref<16x128xbf16, #tpu.memory_space<vmem>>) attributes {dimension_semantics = [#tpu.dimension_semantics<parallel>], iteration_bounds = array<i64: 1>, scalar_prefetch = 0 : i64, scratch_operands = 0 : i64, tpu.core_type = #tpu.core_type<tc>, window_params = [{transform_indices = @transform_0, window_bounds = array<i64: 16, 128>}, {pipeline_mode = #tpu.pipeline_mode<synchronous>, transform_indices = @transform_1, window_bounds = array<i64: 128, 128>}, {pipeline_mode = #tpu.pipeline_mode<synchronous>, transform_indices = @transform_2, window_bounds = array<i64: 1, 128>}, {pipeline_mode = #tpu.pipeline_mode<synchronous>, transform_indices = @transform_3, window_bounds = array<i64: 128, 128>}, {pipeline_mode = #tpu.pipeline_mode<synchronous>, transform_indices = @transform_4, window_bounds = array<i64: 1, 128>}, {transform_indices = @transform_5, window_bounds = array<i64: 16, 128>}]} {
    %c0 = arith.constant 0 : index
    %c0_0 = arith.constant 0 : index
    %0 = vector.load %arg1[%c0, %c0_0] : memref<16x128xbf16, #tpu.memory_space<vmem>>, vector<16x128xbf16>
    %c0_1 = arith.constant 0 : index
    %c0_2 = arith.constant 0 : index
    %1 = vector.load %arg2[%c0_1, %c0_2] : memref<128x128xbf16, #tpu.memory_space<vmem>>, vector<128x128xbf16>
    %cst = arith.constant dense<0.000000e+00> : vector<16x128xf32>
    %2 = tpu.matmul %0, %1, %cst {dimension_numbers = #tpu.dot_dimension_numbers<[1], [0], [0], [1], [0, 0, 1, 1], [], []>} : vector<16x128xbf16>, vector<128x128xbf16>, vector<16x128xf32> -> vector<16x128xf32>
    %c0_3 = arith.constant 0 : index
    %c0_4 = arith.constant 0 : index
    %3 = vector.load %arg3[%c0_3, %c0_4] : memref<1x128xf32, #tpu.memory_space<vmem>>, vector<1x128xf32>
    %4 = vector.broadcast %3 : vector<1x128xf32> to vector<16x128xf32>
    %5 = arith.addf %2, %4 : vector<16x128xf32>
    %cst_5 = arith.constant 0.000000e+00 : f32
    %6 = vector.broadcast %cst_5 : f32 to vector<16x128xf32>
    %7 = arith.maximumf %5, %6 : vector<16x128xf32>
    %8 = arith.truncf %7 : vector<16x128xf32> to vector<16x128xbf16>
    %c0_6 = arith.constant 0 : index
    %c0_7 = arith.constant 0 : index
    %9 = vector.load %arg4[%c0_6, %c0_7] : memref<128x128xbf16, #tpu.memory_space<vmem>>, vector<128x128xbf16>
    %cst_8 = arith.constant dense<0.000000e+00> : vector<16x128xf32>
    %10 = tpu.matmul %8, %9, %cst_8 {dimension_numbers = #tpu.dot_dimension_numbers<[1], [0], [0], [1], [0, 0, 1, 1], [], []>} : vector<16x128xbf16>, vector<128x128xbf16>, vector<16x128xf32> -> vector<16x128xf32>
    %c0_9 = arith.constant 0 : index
    %c0_10 = arith.constant 0 : index
    %11 = vector.load %arg5[%c0_9, %c0_10] : memref<1x128xf32, #tpu.memory_space<vmem>>, vector<1x128xf32>
    %12 = vector.broadcast %11 : vector<1x128xf32> to vector<16x128xf32>
    %13 = arith.addf %10, %12 : vector<16x128xf32>
    %14 = arith.truncf %13 : vector<16x128xf32> to vector<16x128xbf16>
    %c0_11 = arith.constant 0 : index
    %c0_12 = arith.constant 0 : index
    %15 = vector.load %arg6[%c0_11, %c0_12] : memref<16x128xbf16, #tpu.memory_space<vmem>>, vector<16x128xbf16>
    tpu.vector_store %arg6[%c0_11, %c0_12], %14 {strides = array<i32>} : memref<16x128xbf16, #tpu.memory_space<vmem>>, vector<16x128xbf16>,
    return
  }
  func.func @transform_0(%arg0: i32) -> (i32, i32) {
    %c0_i32 = arith.constant 0 : i32
    %c0_i32_0 = arith.constant 0 : i32
    return %arg0, %c0_i32 : i32, i32
  }
  func.func @transform_1(%arg0: i32) -> (i32, i32) {
    %c0_i32 = arith.constant 0 : i32
    %c0_i32_0 = arith.constant 0 : i32
    %c0_i32_1 = arith.constant 0 : i32
    return %c0_i32, %c0_i32_0 : i32, i32
  }
  func.func @transform_2(%arg0: i32) -> (i32, i32) {
    %c0_i32 = arith.constant 0 : i32
    %c0_i32_0 = arith.constant 0 : i32
    %c0_i32_1 = arith.constant 0 : i32
    return %c0_i32, %c0_i32_0 : i32, i32
  }
  func.func @transform_3(%arg0: i32) -> (i32, i32) {
    %c0_i32 = arith.constant 0 : i32
    %c0_i32_0 = arith.constant 0 : i32
    %c0_i32_1 = arith.constant 0 : i32
    return %c0_i32, %c0_i32_0 : i32, i32
  }
  func.func @transform_4(%arg0: i32) -> (i32, i32) {
    %c0_i32 = arith.constant 0 : i32
    %c0_i32_0 = arith.constant 0 : i32
    %c0_i32_1 = arith.constant 0 : i32
    return %c0_i32, %c0_i32_0 : i32, i32
  }
  func.func @transform_5(%arg0: i32) -> (i32, i32) {
    %c0_i32 = arith.constant 0 : i32
    %c0_i32_0 = arith.constant 0 : i32
    return %arg0, %c0_i32 : i32, i32
  }
}

</mosaic_0001>

<llo_original>
// kernel: tpu_custom_call.1
$region0: #{tpu_custom_call.1}
  #allocation0 [shape = 'u32[]', space=smem, size = 0x4, offset = 0x4, fixed_abs, tag = 'smem constant byte address 0x4 - core index']
  #allocation1 [shape = 'u32[144,128]{1,0:T(1,128)}', space=vmem, size = 0x12000, scoped, tag = 'internal scratch']
  %s0 = inlined_call_operand.hbm [shape: bf16[16,128], index: 0, kind: input, shape index: {}]
  %s1 = inlined_call_operand.hbm [shape: bf16[128,128], index: 1, kind: input, shape index: {}]
  %s2 = inlined_call_operand.vmem [shape: f32[1,128], index: 2, kind: input, shape index: {}]
  %s3 = inlined_call_operand.hbm [shape: bf16[128,128], index: 3, kind: input, shape index: {}]
  %s4 = inlined_call_operand.vmem [shape: f32[1,128], index: 4, kind: input, shape index: {}]
  %s5 = inlined_call_operand.hbm [shape: bf16[16,128], index: 5, kind: output, shape index: {}]
  %s6 = sld [smem:[#allocation0]]
  $region42: #{tpu_custom_call.1} parent=0
    _
  %s8 = ssub.s32 1, %s6
  %s9 = scalar_select 0, %s8, %s6
  $region1: #{tpu_custom_call.1} parent=0
    #allocation2 [shape = 'u8[4096]{0}', space=vmem, size = 0x1000, scoped, tag = 'input window, operand 0, single buffered']
    #allocation3 [shape = 's32[1]{0}', space=sflag, size = 0x4, scoped, tag = 'scoped memory for tpu_custom_call.1']
    #allocation4 [shape = 's32[1]{0}', space=sflag, size = 0x4, scoped, tag = 'scoped memory for tpu_custom_call.1']
    #allocation5 [shape = 'u8[32768]{0}', space=vmem, size = 0x8000, scoped, tag = 'input window, operand 1, single buffered']
    #allocation6 [shape = 's32[1]{0}', space=sflag, size = 0x4, scoped, tag = 'scoped memory for tpu_custom_call.1']
    #allocation7 [shape = 'u8[32768]{0}', space=vmem, size = 0x8000, scoped, tag = 'input window, operand 3, single buffered']
    #allocation8 [shape = 'u8[4096]{0}', space=vmem, size = 0x1000, scoped, tag = 'output window, operand 0, single buffered']
    %10 = vsyncpa [#allocation3], 0
    %11 = vsyncpa [#allocation6], 0
    %12 = vsyncpa [#allocation4], 0
    // Predicated region
    $region2: #{tpu_custom_call.1} parent=1 // pred_check
      _
    $region3: #{tpu_custom_call.1} parent=1 // pred_check_branch
      %14 = sbr.rel (0) target = $region5
    $region4: #{tpu_custom_call.1} parent=1 // pred_region
      %s16 = ssub.s32 128, 128
      %17 = vsyncadd [#allocation3], %s16
      %s18 = sshll.u32 [#allocation2], 4
      %s19 = int_to_ptr.vmem [resolvable:$true] %s18
      %24 = dma.hbm_to_vmem [thread:$0]  %s0, 128, %s19, [#allocation3], 64, 64, 4
    $region5: #{tpu_custom_call.1} parent=1 // pred_fallthru
      _
    // Predicated region
    $region6: #{tpu_custom_call.1} parent=1 // pred_check
      _
    $region7: #{tpu_custom_call.1} parent=1 // pred_check_branch
      %26 = sbr.rel (0) target = $region9
    $region8: #{tpu_custom_call.1} parent=1 // pred_region
      %s28 = ssub.s32 1024, 1024
      %29 = vsyncadd [#allocation6], %s28
      %s30 = sshll.u32 [#allocation5], 4
      %s31 = int_to_ptr.vmem [resolvable:$true] %s30
      %36 = dma.hbm_to_vmem [thread:$0]  %s1, 1024, %s31, [#allocation6], 64, 64, 4
    $region9: #{tpu_custom_call.1} parent=1 // pred_fallthru
      _
    // Predicated region
    $region10: #{tpu_custom_call.1} parent=1 // pred_check
      _
    $region11: #{tpu_custom_call.1} parent=1 // pred_check_branch
      %38 = sbr.rel (0) target = $region13
    $region12: #{tpu_custom_call.1} parent=1 // pred_region
      _
    $region13: #{tpu_custom_call.1} parent=1 // pred_fallthru
      _
    // Predicated region
    $region14: #{tpu_custom_call.1} parent=1 // pred_check
      _
    $region15: #{tpu_custom_call.1} parent=1 // pred_check_branch
      %40 = sbr.rel (0) target = $region17
    $region16: #{tpu_custom_call.1} parent=1 // pred_region
      %s42 = ssub.s32 1024, 1024
      %43 = vsyncadd [#allocation6], %s42
      %s44 = sshll.u32 [#allocation7], 4
      %s45 = int_to_ptr.vmem [resolvable:$true] %s44
      %50 = dma.hbm_to_vmem [thread:$0]  %s3, 1024, %s45, [#allocation6], 64, 64, 4
    $region17: #{tpu_custom_call.1} parent=1 // pred_fallthru
      _
    // Predicated region
    $region18: #{tpu_custom_call.1} parent=1 // pred_check
      _
    $region19: #{tpu_custom_call.1} parent=1 // pred_check_branch
      %52 = sbr.rel (0) target = $region21
    $region20: #{tpu_custom_call.1} parent=1 // pred_region
      _
    $region21: #{tpu_custom_call.1} parent=1 // pred_fallthru
      _
    // Predicated region
    $region22: #{tpu_custom_call.1} parent=1 // pred_check
      _
    $region23: #{tpu_custom_call.1} parent=1 // pred_check_branch
      %54 = sbr.rel (0) target = $region25
    $region24: #{tpu_custom_call.1} parent=1 // pred_region
      %55 = dma.done [#allocation3], 128
    $region25: #{tpu_custom_call.1} parent=1 // pred_fallthru
      _
    // Predicated region
    $region26: #{tpu_custom_call.1} parent=1 // pred_check
      _
    $region27: #{tpu_custom_call.1} parent=1 // pred_check_branch
      %57 = sbr.rel (0) target = $region29
    $region28: #{tpu_custom_call.1} parent=1 // pred_region
      %58 = dma.done [#allocation6], 1024
    $region29: #{tpu_custom_call.1} parent=1 // pred_fallthru
      _
    // Predicated region
    $region30: #{tpu_custom_call.1} parent=1 // pred_check
      _
    $region31: #{tpu_custom_call.1} parent=1 // pred_check_branch
      %60 = sbr.rel (0) target = $region33
    $region32: #{tpu_custom_call.1} parent=1 // pred_region
      %61 = dma.done [#allocation6], 1024
    $region33: #{tpu_custom_call.1} parent=1 // pred_fallthru
      _
    %v63 = vld [vmem:[#allocation2] sm:$0xf]
    %v64 = vld [vmem:[#allocation2 + $0x4] sm:$0xf]
    %v65 = vld [vmem:[#allocation5] sm:$0xf]
    %v66 = vld [vmem:[#allocation5 + $0x4] sm:$0xf]
    %v67 = vld [vmem:[#allocation5 + $0x8] sm:$0xf]
    %v68 = vld [vmem:[#allocation5 + $0xc] sm:$0xf]
    %v69 = vld [vmem:[#allocation5 + $0x10] sm:$0xf]
    %v70 = vld [vmem:[#allocation5 + $0x14] sm:$0xf]
    %v71 = vld [vmem:[#allocation5 + $0x18] sm:$0xf]
    %v72 = vld [vmem:[#allocation5 + $0x1c] sm:$0xf]
    %v73 = vld [vmem:[#allocation5 + $0x20] sm:$0xf]
    %v74 = vld [vmem:[#allocation5 + $0x24] sm:$0xf]
    %v75 = vld [vmem:[#allocation5 + $0x28] sm:$0xf]
    %v76 = vld [vmem:[#allocation5 + $0x2c] sm:$0xf]
    %v77 = vld [vmem:[#allocation5 + $0x30] sm:$0xf]
    %v78 = vld [vmem:[#allocation5 + $0x34] sm:$0xf]
    %v79 = vld [vmem:[#allocation5 + $0x38] sm:$0xf]
    %v80 = vld [vmem:[#allocation5 + $0x3c] sm:$0xf]
    %v81 = vld [vmem:[%s2] sm:$0x1]
    %v83 = vlaneseq
    %v84 = vshrl.u32 %v83, 7
    %v85 = vsub.s32 0, %v84
    %v86 = vrot.slane %v81, %v85
    %v90 = vunpack.c.l.b16 %v63
    %v91 = vunpack.c.l.b16 %v64
    %v92 = vpack.c.b16 %v91, %v90
    %v110 = vunpack.c.l.b16 %v65
    %v111 = vunpack.c.l.b16 %v66
    %v112 = vunpack.c.l.b16 %v67
    %v113 = vunpack.c.l.b16 %v68
    %v114 = vunpack.c.l.b16 %v69
    %v115 = vunpack.c.l.b16 %v70
    %v116 = vunpack.c.l.b16 %v71
    %v117 = vunpack.c.l.b16 %v72
    %v118 = vunpack.c.l.b16 %v73
    %v119 = vunpack.c.l.b16 %v74
    %v120 = vunpack.c.l.b16 %v75
    %v121 = vunpack.c.l.b16 %v76
    %v122 = vunpack.c.l.b16 %v77
    %v123 = vunpack.c.l.b16 %v78
    %v124 = vunpack.c.l.b16 %v79
    %v125 = vunpack.c.l.b16 %v80
    %v126 = vpack.c.b16 %v111, %v110
    %v127 = vpack.c.b16 %v113, %v112
    %v128 = vpack.c.b16 %v115, %v114
    %v129 = vpack.c.b16 %v117, %v116
    %v130 = vpack.c.b16 %v119, %v118
    %v131 = vpack.c.b16 %v121, %v120
    %v132 = vpack.c.b16 %v123, %v122
    %v133 = vpack.c.b16 %v125, %v124
    %142 = vmatprep.subr.bf16.mxu0 0
    %143 = vmatpush1.bf16.msra.mxu0 %v133
    %144 = vmatprep.subr.bf16.mxu0 0
    %145 = vmatpush1.bf16.msra.mxu0 %v132
    %146 = vmatprep.subr.bf16.mxu0 0
    %147 = vmatpush1.bf16.msra.mxu0 %v131
    %148 = vmatprep.subr.bf16.mxu0 0
    %149 = vmatpush1.bf16.msra.mxu0 %v130
    %150 = vmatprep.subr.bf16.mxu0 0
    %151 = vmatpush1.bf16.msra.mxu0 %v129
    %152 = vmatprep.subr.bf16.mxu0 0
    %153 = vmatpush1.bf16.msra.mxu0 %v128
    %154 = vmatprep.subr.bf16.mxu0 0
    %155 = vmatpush1.bf16.msra.mxu0 %v127
    %156 = vmatprep.subr.bf16.mxu0 0
    %157 = vmatpush1.bf16.msra.mxu0 %v126
    %158 = vmatprep.subr.bf16.mxu0 0
    %159 = vmatpush2.bf16.msra.mxu0 0
    %160 = vmatprep.subr.bf16.mxu0 0
    %161 = vmatpush2.bf16.msra.mxu0 0
    %162 = vmatprep.subr.bf16.mxu0 0
    %163 = vmatpush2.bf16.msra.mxu0 0
    %164 = vmatprep.subr.bf16.mxu0 0
    %165 = vmatpush2.bf16.msra.mxu0 0
    %166 = vmatprep.subr.bf16.mxu0 0
    %167 = vmatpush2.bf16.msra.mxu0 0
    %168 = vmatprep.subr.bf16.mxu0 0
    %169 = vmatpush2.bf16.msra.mxu0 0
    %170 = vmatprep.subr.bf16.mxu0 0
    %171 = vmatpush2.bf16.msra.mxu0 0
    %172 = vmatprep.subr.bf16.mxu0 0
    %173 = vmatpush2.bf16.msra.mxu0 0
    %174 = vmatprep.mubr.bf16.mxu0 0
    %175 = vmatmul.mubr.bf16.gmra.mxu0 %v92
    %v176 = vpop.f32.mrf.mxu0
    %v177 = vadd.f32 %v86, %v176
    %v178 = vpop.f32.mrf.mxu0
    %v179 = vpop.f32.mrf.mxu0
    %v180 = vadd.f32 %v86, %v179
    %v181 = vpop.f32.mrf.mxu0
    %182 = vdwg.mxu0
    %v183 = vmax.f32 %v177, 0.0
    %v184 = vmax.f32 %v180, 0.0
    %v185 = vpack.c.bf16 %v184, %v183
    %v186 = vld [vmem:[#allocation7] sm:$0xf]
    %v187 = vld [vmem:[#allocation7 + $0x4] sm:$0xf]
    %v188 = vld [vmem:[#allocation7 + $0x8] sm:$0xf]
    %v189 = vld [vmem:[#allocation7 + $0xc] sm:$0xf]
    %v190 = vld [vmem:[#allocation7 + $0x10] sm:$0xf]
    %v191 = vld [vmem:[#allocation7 + $0x14] sm:$0xf]
    %v192 = vld [vmem:[#allocation7 + $0x18] sm:$0xf]
    %v193 = vld [vmem:[#allocation7 + $0x1c] sm:$0xf]
    %v194 = vld [vmem:[#allocation7 + $0x20] sm:$0xf]
    %v195 = vld [vmem:[#allocation7 + $0x24] sm:$0xf]
    %v196 = vld [vmem:[#allocation7 + $0x28] sm:$0xf]
    %v197 = vld [vmem:[#allocation7 + $0x2c] sm:$0xf]
    %v198 = vld [vmem:[#allocation7 + $0x30] sm:$0xf]
    %v199 = vld [vmem:[#allocation7 + $0x34] sm:$0xf]
    %v200 = vld [vmem:[#allocation7 + $0x38] sm:$0xf]
    %v201 = vld [vmem:[#allocation7 + $0x3c] sm:$0xf]
    %v202 = vld [vmem:[%s4] sm:$0x1]
    %v204 = vlaneseq
    %v205 = vshrl.u32 %v204, 7
    %v206 = vsub.s32 0, %v205
    %v207 = vrot.slane %v202, %v206
    %v225 = vunpack.c.l.b16 %v186
    %v226 = vunpack.c.l.b16 %v187
    %v227 = vunpack.c.l.b16 %v188
    %v228 = vunpack.c.l.b16 %v189
    %v229 = vunpack.c.l.b16 %v190
    %v230 = vunpack.c.l.b16 %v191
    %v231 = vunpack.c.l.b16 %v192
    %v232 = vunpack.c.l.b16 %v193
    %v233 = vunpack.c.l.b16 %v194
    %v234 = vunpack.c.l.b16 %v195
    %v235 = vunpack.c.l.b16 %v196
    %v236 = vunpack.c.l.b16 %v197
    %v237 = vunpack.c.l.b16 %v198
    %v238 = vunpack.c.l.b16 %v199
    %v239 = vunpack.c.l.b16 %v200
    %v240 = vunpack.c.l.b16 %v201
    %v241 = vpack.c.b16 %v226, %v225
    %v242 = vpack.c.b16 %v228, %v227
    %v243 = vpack.c.b16 %v230, %v229
    %v244 = vpack.c.b16 %v232, %v231
    %v245 = vpack.c.b16 %v234, %v233
    %v246 = vpack.c.b16 %v236, %v235
    %v247 = vpack.c.b16 %v238, %v237
    %v248 = vpack.c.b16 %v240, %v239
    %257 = vmatprep.subr.bf16.mxu0 0
    %258 = vmatpush1.bf16.msra.mxu0 %v248
    %259 = vmatprep.subr.bf16.mxu0 0
    %260 = vmatpush1.bf16.msra.mxu0 %v247
    %261 = vmatprep.subr.bf16.mxu0 0
    %262 = vmatpush1.bf16.msra.mxu0 %v246
    %263 = vmatprep.subr.bf16.mxu0 0
    %264 = vmatpush1.bf16.msra.mxu0 %v245
    %265 = vmatprep.subr.bf16.mxu0 0
    %266 = vmatpush1.bf16.msra.mxu0 %v244
    %267 = vmatprep.subr.bf16.mxu0 0
    %268 = vmatpush1.bf16.msra.mxu0 %v243
    %269 = vmatprep.subr.bf16.mxu0 0
    %270 = vmatpush1.bf16.msra.mxu0 %v242
    %271 = vmatprep.subr.bf16.mxu0 0
    %272 = vmatpush1.bf16.msra.mxu0 %v241
    %273 = vmatprep.subr.bf16.mxu0 0
    %274 = vmatpush2.bf16.msra.mxu0 0
    %275 = vmatprep.subr.bf16.mxu0 0
    %276 = vmatpush2.bf16.msra.mxu0 0
    %277 = vmatprep.subr.bf16.mxu0 0
    %278 = vmatpush2.bf16.msra.mxu0 0
    %279 = vmatprep.subr.bf16.mxu0 0
    %280 = vmatpush2.bf16.msra.mxu0 0
    %281 = vmatprep.subr.bf16.mxu0 0
    %282 = vmatpush2.bf16.msra.mxu0 0
    %283 = vmatprep.subr.bf16.mxu0 0
    %284 = vmatpush2.bf16.msra.mxu0 0
    %285 = vmatprep.subr.bf16.mxu0 0
    %286 = vmatpush2.bf16.msra.mxu0 0
    %287 = vmatprep.subr.bf16.mxu0 0
    %288 = vmatpush2.bf16.msra.mxu0 0
    %289 = vmatprep.mubr.bf16.mxu0 0
    %290 = vmatmul.mubr.bf16.gmra.mxu0 %v185
    %v291 = vpop.f32.mrf.mxu0
    %v292 = vadd.f32 %v207, %v291
    %v293 = vpop.f32.mrf.mxu0
    %v294 = vpop.f32.mrf.mxu0
    %v295 = vadd.f32 %v207, %v294
    %v296 = vpop.f32.mrf.mxu0
    %297 = vdwg.mxu0
    %v298 = vpack.c.bf16 %v295, %v292
    %v300 = vunpack.c.l.b16 %v298
    %v301 = vunpack.c.h.b16 %v298
    %v302 = vpack.c.b16 %v300, %v300
    %v303 = vpack.c.b16 %v301, %v301
    %306 = vst [vmem:[#allocation8] sm:$0xf] %v302
    %307 = vst [vmem:[#allocation8 + $0x4] sm:$0xf] %v303
    // Predicated region
    $region34: #{tpu_custom_call.1} parent=1 // pred_check
      _
    $region35: #{tpu_custom_call.1} parent=1 // pred_check_branch
      %309 = sbr.rel (0) target = $region37
    $region36: #{tpu_custom_call.1} parent=1 // pred_region
      %s311 = ssub.s32 128, 128
      %312 = vsyncadd [#allocation4], %s311
      %s313 = sshll.u32 [#allocation8], 4
      %s314 = int_to_ptr.vmem [resolvable:$true] %s313
      %319 = dma.vmem_to_hbm [thread:$0]  %s314, 128, %s5, [#allocation4], 64, 64, 4
    $region37: #{tpu_custom_call.1} parent=1 // pred_fallthru
      _
    // Predicated region
    $region38: #{tpu_custom_call.1} parent=1 // pred_check
      _
    $region39: #{tpu_custom_call.1} parent=1 // pred_check_branch
      %321 = sbr.rel (0) target = $region41
    $region40: #{tpu_custom_call.1} parent=1 // pred_region
      %322 = dma.done [#allocation4], 128
    $region41: #{tpu_custom_call.1} parent=1 // pred_fallthru
      _
    %323 = vsyncpa [#allocation3], 1
    %324 = vsyncpa [#allocation6], 1
    %325 = vsyncpa [#allocation4], 1

</llo_original>
